<compile_context>
chip_gen: v6e
topology: v6e:2x2x1
jax: 0.10.0
libtpu: 0.0.40
codegen_flags: <defaults>
</compile_context>

<pallas_src>
import jax
import jax.numpy as jnp
from jax.experimental import pallas as pl
from jax.experimental.pallas import tpu as pltpu


# ----------------------------------------------------------------------------
# kernels
# ----------------------------------------------------------------------------
def _fc1_kernel(x_ref, w1_ref, cb_ref, h1_ref, acc_ref):
    """h1[:, n] = relu( sum_k x[:, k] @ W1x[k, n] + cond_bias[:, n] )."""
    k = pl.program_id(1)

    @pl.when(k == 0)
    def _init():
        acc_ref[...] = jnp.zeros_like(acc_ref)

    acc_ref[...] += jnp.dot(x_ref[...], w1_ref[...],
                            preferred_element_type=jnp.float32)

    @pl.when(k == pl.num_programs(1) - 1)
    def _finalize():
        h1_ref[...] = jnp.maximum(acc_ref[...] + cb_ref[...],
                                  0.0).astype(h1_ref.dtype)


def _fc2_kernel(h1_ref, w2_ref, b2_ref, h2_ref):
    """h2 = relu(h1 @ W2 + b2)  -- single step, everything resident in VMEM."""
    h2 = jnp.dot(h1_ref[...], w2_ref[...], preferred_element_type=jnp.float32)
    h2_ref[...] = jnp.maximum(h2 + b2_ref[...], 0.0).astype(h2_ref.dtype)


def _fc3_kernel(h2_ref, w3_ref, b3_ref, o_ref):
    """o[:, n] = h2 @ W3[:, n] + b3[:, n]  (W3 streamed in lane-dense N tiles)."""
    o_ref[...] = (jnp.dot(h2_ref[...], w3_ref[...],
                          preferred_element_type=jnp.float32)
                  + b3_ref[...]).astype(o_ref.dtype)


# ----------------------------------------------------------------------------
# tiling / config helpers
# ----------------------------------------------------------------------------
_TK_MAX = 8192     # fc1 Din reduction tile  (~7.7 MB bf16 weight tile at Din=22500)
_TN1 = 512         # h1 column tile (1024 -> 2 parallel tiles for v7x megacore)
_TN3_MAX = 4096    # fc3 output-Din tile     (~3.9 MB bf16 weight tile)


def _round_up(a, m):
    return (a + m - 1) // m * m


def _pick_tile(dim, max_tile):
    """Return (num_tiles, tile, padded_dim): 128-aligned tiles, minimal padding."""
    d128 = _round_up(dim, 128)
    n = pl.cdiv(d128, max_tile)
    t = _round_up(pl.cdiv(d128, n), 128)
    return n, t, n * t


def _vmem_limit_bytes():
    """Half of physical per-core VMEM: 32 MiB on v7x (64 MiB/TC), 64 MiB on
    v5e/v6e (128 MiB).  Actual kernel usage is <= ~30 MB, so the limit only
    needs to be v7x-safe; clamp to [32, 64] MiB with a safe fallback."""
    try:
        cap = int(pltpu.get_tpu_info().vmem_capacity_bytes)
    except Exception:
        cap = 64 * 1024 * 1024
    return int(min(max(cap // 2, 32 * 1024 * 1024), 64 * 1024 * 1024))


def _streamed_spec(block_shape, index_map, n_steps):
    """BlockSpec for a streamed weight tile: 3-deep buffering when the grid is
    long enough to benefit, default double-buffering otherwise, and a plain
    BlockSpec fallback if this JAX build lacks `pipeline_mode`."""
    bufs = 3 if n_steps >= 3 else 2
    try:
        return pl.BlockSpec(block_shape, index_map,
                            pipeline_mode=pl.Buffered(bufs))
    except TypeError:  # older JAX without pipeline_mode kwarg
        return pl.BlockSpec(block_shape, index_map)


# ----------------------------------------------------------------------------
# one-time parameter preparation (hoisted out of the per-call forward)
# ----------------------------------------------------------------------------
def prepare_params(params, input_size):
    """Pad + cast the large weights once.  fc1's weight is pre-split into the
    x part (streamed) and the condition part (folded into a per-row bias)."""
    w1x, w1c, b1, w2, b2, w3, b3 = params
    nk, tk, din_k = _pick_tile(input_size, _TK_MAX)      # fc1 reduction axis
    nn, tn, din_n = _pick_tile(input_size, _TN3_MAX)     # fc3 output axis
    return {
        "w1": jnp.pad(w1x, ((0, din_k - input_size), (0, 0))).astype(jnp.bfloat16),
        "w1c": w1c.astype(jnp.float32),
        "b1": b1.astype(jnp.float32),
        "w2": w2.astype(jnp.bfloat16),
        "b2": b2.astype(jnp.float32),
        "w3": jnp.pad(w3, ((0, 0), (0, din_n - input_size))).astype(jnp.bfloat16),
        "b3": jnp.pad(b3, ((0, 0), (0, din_n - input_size))).astype(jnp.float32),
        "din": input_size,
        "tiles": (nk, tk, din_k, nn, tn, din_n),
    }


# ----------------------------------------------------------------------------
# forward
# ----------------------------------------------------------------------------
def conditional_diffusion_forward(x, condition, prepared):
    """x: (B, Din) f32, condition: (B, Dc) f32 -> (B, Din) f32."""
    w1_p, w1c, b1 = prepared["w1"], prepared["w1c"], prepared["b1"]
    w2_b, b2_f = prepared["w2"], prepared["b2"]
    w3_p, b3_p = prepared["w3"], prepared["b3"]
    Din = prepared["din"]
    nk, tk, din_k, nn, tn, din_n = prepared["tiles"]

    B = x.shape[0]
    H1 = w1_p.shape[1]                      # 1024
    H2 = w2_b.shape[1]                      # 512
    tn1 = _TN1 if H1 % _TN1 == 0 else H1
    nn1 = H1 // tn1
    vmem_limit = _vmem_limit_bytes()

    # Fold the tiny (K = 16) condition matmul and fc1 bias into one per-row
    # bias (exact split-matmul identity):  cat([x, c]) @ W1 + b1
    #                                   == x @ W1x + (c @ W1c + b1).
    cond_bias = (jnp.dot(condition, w1c, preferred_element_type=jnp.float32)
                 + b1).astype(jnp.float32)                        # (B, H1)

    # Only the activation is padded/cast per call (weights are pre-prepared).
    x_p = jnp.pad(x, ((0, 0), (0, din_k - Din))).astype(jnp.bfloat16)

    # ------------------- kernel A: fc1 (K-streamed reduction) ---------------
    h1 = pl.pallas_call(
        _fc1_kernel,
        out_shape=jax.ShapeDtypeStruct((B, H1), jnp.bfloat16),
        grid_spec=pltpu.PrefetchScalarGridSpec(
            num_scalar_prefetch=0,
            grid=(nn1, nk),
            in_specs=[
                pl.BlockSpec((B, tk), lambda n, k: (0, k)),           # x K-tile
                _streamed_spec((tk, tn1), lambda n, k: (k, n),        # W1x tile
                               n_steps=nn1 * nk),
                pl.BlockSpec((B, tn1), lambda n, k: (0, n)),          # cond_bias
            ],
            out_specs=pl.BlockSpec((B, tn1), lambda n, k: (0, n)),
            scratch_shapes=[pltpu.VMEM((B, tn1), jnp.float32)],
        ),
        compiler_params=pltpu.CompilerParams(
            dimension_semantics=("parallel", "arbitrary"),
            vmem_limit_bytes=vmem_limit),
        cost_estimate=pl.CostEstimate(
            flops=int(2 * B * din_k * H1),
            transcendentals=0,
            bytes_accessed=int(2 * din_k * H1 + 2 * B * din_k * nn1
                               + 4 * B * H1 + 2 * B * H1)),
    )(x_p, w1_p, cond_bias)

    # ------------------- kernel B: fc2 (single step, all resident) ----------
    h2 = pl.pallas_call(
        _fc2_kernel,
        out_shape=jax.ShapeDtypeStruct((B, H2), jnp.bfloat16),
        compiler_params=pltpu.CompilerParams(vmem_limit_bytes=vmem_limit),
        cost_estimate=pl.CostEstimate(
            flops=int(2 * B * H1 * H2),
            transcendentals=0,
            bytes_accessed=int(2 * B * H1 + 2 * H1 * H2 + 4 * H2 + 2 * B * H2)),
    )(h1, w2_b, b2_f)

    # ------------------- kernel C: fc3 (N-streamed over Din) ----------------
    out_p = pl.pallas_call(
        _fc3_kernel,
        out_shape=jax.ShapeDtypeStruct((B, din_n), jnp.float32),
        grid_spec=pltpu.PrefetchScalarGridSpec(
            num_scalar_prefetch=0,
            grid=(nn,),
            in_specs=[
                pl.BlockSpec((B, H2), lambda n: (0, 0)),              # h2 (resident)
                _streamed_spec((H2, tn), lambda n: (0, n), n_steps=nn),  # W3 N-tile
                pl.BlockSpec((1, tn), lambda n: (0, n)),              # b3 N-tile
            ],
            out_specs=pl.BlockSpec((B, tn), lambda n: (0, n)),
        ),
        compiler_params=pltpu.CompilerParams(
            dimension_semantics=("parallel",),
            vmem_limit_bytes=vmem_limit),
        cost_estimate=pl.CostEstimate(
            flops=int(2 * B * H2 * din_n),
            transcendentals=0,
            bytes_accessed=int(2 * B * H2 + 2 * H2 * din_n
                               + 4 * din_n + 4 * B * din_n)),
    )(h2, w3_p, b3_p)

    return out_p[:, :Din]


# ----------------------------------------------------------------------------
# params / reference
# ----------------------------------------------------------------------------
def init_params(key, input_size, cond_size, h1=1024, h2=512):
    """PyTorch-style uniform(+-1/sqrt(fan_in)) init; weights as (in, out).
    fc1's weight is pre-split into the x part and the condition part."""
    def linear(k, fan_in, fan_out):
        kw, kb = jax.random.split(k)
        bound = 1.0 / (fan_in ** 0.5)
        w = jax.random.uniform(kw, (fan_in, fan_out), jnp.float32, -bound, bound)
        b = jax.random.uniform(kb, (1, fan_out), jnp.float32, -bound, bound)
        return w, b

    k1, k2, k3 = jax.random.split(key, 3)
    w1, b1 = linear(k1, input_size + cond_size, h1)
    w2, b2 = linear(k2, h1, h2)
    w3, b3 = linear(k3, h2, input_size)
    return (w1[:input_size], w1[input_size:], b1, w2, b2, w3, b3)


def reference_forward(x, condition, params):
    """Pure-JAX reference using the same bf16-operand / f32-accumulate recipe."""
    w1x, w1c, b1, w2, b2, w3, b3 = params
    bf = jnp.bfloat16
    cond_bias = jnp.dot(condition, w1c, preferred_element_type=jnp.float32) + b1
    h1 = jax.nn.relu(jnp.dot(x.astype(bf), w1x.astype(bf),
                             preferred_element_type=jnp.float32) + cond_bias)
    h2 = jax.nn.relu(jnp.dot(h1.astype(bf), w2.astype(bf),
                             preferred_element_type=jnp.float32) + b2)
    return jnp.dot(h2.astype(bf), w3.astype(bf),
                   preferred_element_type=jnp.float32) + b3


if __name__ == "__main__":
    # Small shapes consistent with the module (production: Din=22500, cond=16).
    batch = 8
    input_size = 512
    weight_template_size = 16

    key = jax.random.PRNGKey(0)
    kx, kc, kp = jax.random.split(key, 3)
    x = jax.random.normal(kx, (batch, input_size), jnp.float32)
    condition = jax.random.normal(kc, (batch, weight_template_size), jnp.float32)
    raw_params = init_params(kp, input_size, weight_template_size)

    # One-time pad/cast of the weights (hoisted out of the per-call forward).
    prepared = prepare_params(raw_params, input_size)

    out = jax.block_until_ready(
        conditional_diffusion_forward(x, condition, prepared))
    ref = reference_forward(x, condition, raw_params)

    assert out.shape == (batch, input_size)
    assert jnp.allclose(out, ref, atol=1e-2, rtol=1e-2), \
        float(jnp.max(jnp.abs(out - ref)))

    print("KERNEL_OK")
</pallas_src>

<mosaic_0001>
module attributes {stable_mosaic.version = 11 : i64} {
  func.func @_fc1_kernel(%arg0: i32, %arg1: i32, %arg2: memref<8x512xbf16, #tpu.memory_space<vmem>>, %arg3: memref<512x512xbf16, #tpu.memory_space<vmem>>, %arg4: memref<8x512xf32, #tpu.memory_space<vmem>>, %arg5: memref<8x512xbf16, #tpu.memory_space<vmem>>, %arg6: memref<8x512xf32, #tpu.memory_space<vmem>>) attributes {dimension_semantics = [#tpu.dimension_semantics<parallel>, #tpu.dimension_semantics<arbitrary>], iteration_bounds = array<i64: 2, 1>, scalar_prefetch = 0 : i64, scratch_operands = 1 : i64, tpu.core_type = #tpu.core_type<tc>, window_params = [{transform_indices = @transform_0, window_bounds = array<i64: 8, 512>}, {pipeline_mode = #tpu.pipeline_mode<double_buffered>, transform_indices = @transform_1, window_bounds = array<i64: 512, 512>}, {transform_indices = @transform_2, window_bounds = array<i64: 8, 512>}, {transform_indices = @transform_3, window_bounds = array<i64: 8, 512>}]} {
    %c0_i32 = arith.constant 0 : i32
    %0 = arith.cmpi eq, %arg1, %c0_i32 : i32
    %1 = arith.extui %0 : i1 to i32
    %c0_i32_0 = arith.constant 0 : i32
    %2 = arith.cmpi ne, %1, %c0_i32_0 : i32
    scf.if %2 {
      %cst_10 = arith.constant 0.000000e+00 : f32
      %12 = vector.broadcast %cst_10 : f32 to vector<8x512xf32>
      %c0_11 = arith.constant 0 : index
      %c0_12 = arith.constant 0 : index
      %13 = vector.load %arg6[%c0_11, %c0_12] : memref<8x512xf32, #tpu.memory_space<vmem>>, vector<8x512xf32>
      tpu.vector_store %arg6[%c0_11, %c0_12], %12 {strides = array<i32>} : memref<8x512xf32, #tpu.memory_space<vmem>>, vector<8x512xf32>,
    } else {
    }
    %c0 = arith.constant 0 : index
    %c0_1 = arith.constant 0 : index
    %3 = vector.load %arg6[%c0, %c0_1] : memref<8x512xf32, #tpu.memory_space<vmem>>, vector<8x512xf32>
    %c0_2 = arith.constant 0 : index
    %c0_3 = arith.constant 0 : index
    %4 = vector.load %arg2[%c0_2, %c0_3] : memref<8x512xbf16, #tpu.memory_space<vmem>>, vector<8x512xbf16>
    %c0_4 = arith.constant 0 : index
    %c0_5 = arith.constant 0 : index
    %5 = vector.load %arg3[%c0_4, %c0_5] : memref<512x512xbf16, #tpu.memory_space<vmem>>, vector<512x512xbf16>
    %cst = arith.constant dense<0.000000e+00> : vector<8x512xf32>
    %6 = tpu.matmul %4, %5, %cst {dimension_numbers = #tpu.dot_dimension_numbers<[1], [0], [0], [1], [0, 0, 1, 1], [], []>} : vector<8x512xbf16>, vector<512x512xbf16>, vector<8x512xf32> -> vector<8x512xf32>
    %7 = arith.addf %3, %6 : vector<8x512xf32>
    %c0_6 = arith.constant 0 : index
    %c0_7 = arith.constant 0 : index
    %8 = vector.load %arg6[%c0_6, %c0_7] : memref<8x512xf32, #tpu.memory_space<vmem>>, vector<8x512xf32>
    tpu.vector_store %arg6[%c0_6, %c0_7], %7 {strides = array<i32>} : memref<8x512xf32, #tpu.memory_space<vmem>>, vector<8x512xf32>,
    %c0_i32_8 = arith.constant 0 : i32
    %9 = arith.cmpi eq, %arg1, %c0_i32_8 : i32
    %10 = arith.extui %9 : i1 to i32
    %c0_i32_9 = arith.constant 0 : i32
    %11 = arith.cmpi ne, %10, %c0_i32_9 : i32
    scf.if %11 {
      %c0_10 = arith.constant 0 : index
      %c0_11 = arith.constant 0 : index
      %12 = vector.load %arg6[%c0_10, %c0_11] : memref<8x512xf32, #tpu.memory_space<vmem>>, vector<8x512xf32>
      %c0_12 = arith.constant 0 : index
      %c0_13 = arith.constant 0 : index
      %13 = vector.load %arg4[%c0_12, %c0_13] : memref<8x512xf32, #tpu.memory_space<vmem>>, vector<8x512xf32>
      %14 = arith.addf %12, %13 : vector<8x512xf32>
      %cst_14 = arith.constant 0.000000e+00 : f32
      %15 = vector.broadcast %cst_14 : f32 to vector<8x512xf32>
      %16 = arith.maximumf %14, %15 : vector<8x512xf32>
      %17 = arith.truncf %16 : vector<8x512xf32> to vector<8x512xbf16>
      %c0_15 = arith.constant 0 : index
      %c0_16 = arith.constant 0 : index
      %18 = vector.load %arg5[%c0_15, %c0_16] : memref<8x512xbf16, #tpu.memory_space<vmem>>, vector<8x512xbf16>
      tpu.vector_store %arg5[%c0_15, %c0_16], %17 {strides = array<i32>} : memref<8x512xbf16, #tpu.memory_space<vmem>>, vector<8x512xbf16>,
    } else {
    }
    return
  }
  func.func @transform_0(%arg0: i32, %arg1: i32) -> (i32, i32) {
    %c0_i32 = arith.constant 0 : i32
    %c0_i32_0 = arith.constant 0 : i32
    return %c0_i32, %arg1 : i32, i32
  }
  func.func @transform_1(%arg0: i32, %arg1: i32) -> (i32, i32) {
    %c0_i32 = arith.constant 0 : i32
    return %arg1, %arg0 : i32, i32
  }
  func.func @transform_2(%arg0: i32, %arg1: i32) -> (i32, i32) {
    %c0_i32 = arith.constant 0 : i32
    %c0_i32_0 = arith.constant 0 : i32
    return %c0_i32, %arg0 : i32, i32
  }
  func.func @transform_3(%arg0: i32, %arg1: i32) -> (i32, i32) {
    %c0_i32 = arith.constant 0 : i32
    %c0_i32_0 = arith.constant 0 : i32
    return %c0_i32, %arg0 : i32, i32
  }
}

</mosaic_0001>

<llo_original>
// kernel: tpu_custom_call.1
$region0: #{tpu_custom_call.1}
  #allocation0 [shape = 'u32[]', space=smem, size = 0x4, offset = 0x4, fixed_abs, tag = 'smem constant byte address 0x4 - core index']
  #allocation1 [shape = 'u32[144,128]{1,0:T(1,128)}', space=vmem, size = 0x12000, scoped, tag = 'internal scratch']
  #allocation2 [shape = 'f32[8,512]{1,0:T(8,128)}', space=vmem, size = 0x4000, scoped, tag = 'scratch operand']
  %s0 = inlined_call_operand.hbm [shape: bf16[8,512], index: 0, kind: input, shape index: {}]
  %s1 = inlined_call_operand.hbm [shape: bf16[512,1024], index: 1, kind: input, shape index: {}]
  %s2 = inlined_call_operand.hbm [shape: f32[8,1024], index: 2, kind: input, shape index: {}]
  %s3 = inlined_call_operand.hbm [shape: bf16[8,1024], index: 3, kind: output, shape index: {}]
  %s4 = sld [smem:[#allocation0]]
  $region65: #{tpu_custom_call.1} parent=0
    _
  %s6 = ssub.s32 1, %s4
  %s7 = scalar_select 0, %s6, %s4
  $region1: #{tpu_custom_call.1} parent=0
    #allocation3 [shape = 'u8[8192]{0}', space=vmem, size = 0x2000, scoped, tag = 'input window, operand 0, single buffered']
    #allocation4 [shape = 's32[2]{0}', space=sflag, size = 0x8, scoped, tag = 'scoped memory for tpu_custom_call.1']
    #allocation5 [shape = 's32[2]{0}', space=sflag, size = 0x8, scoped, tag = 'scoped memory for tpu_custom_call.1']
    #allocation6 [shape = 'u8[1048576]{0}', space=vmem, size = 0x100000, scoped, tag = 'input window, operand 1']
    #allocation7 [shape = 's32[2]{0}', space=sflag, size = 0x8, scoped, tag = 'scoped memory for tpu_custom_call.1']
    #allocation8 [shape = 'u8[32768]{0}', space=vmem, size = 0x8000, scoped, tag = 'input window, operand 2']
    #allocation9 [shape = 'u8[16384]{0}', space=vmem, size = 0x4000, scoped, tag = 'output window, operand 0']
    %8 = vsyncpa [#allocation4], 0
    %9 = vsyncpa [#allocation7], 0
    %s10 = scalar_lea.sflag [#allocation7], 1
    %11 = vsyncpa %s10, 0
    %12 = vsyncpa [#allocation5], 0
    %s13 = scalar_lea.sflag [#allocation5], 1
    %14 = vsyncpa %s13, 0
    loop: start=0, step=1, limit=4
    $region2: #{tpu_custom_call.1} parent=1 // loop_pre_header
      _
    $region3: #{tpu_custom_call.1} parent=1 // loop_header
      %s16 = sphi 0, %s20
      %p17 = scmp.ge.s32.totalorder %s16, 4
      %s23 = sphi 0, %s35
      %s24 = sphi 0, %s31
      %s25 = sphi 0, %s23
      %s26 = sphi 0, %s24
      %s27 = sphi 0, %s25
      %s28 = sphi 0, %s26
      %s38 = sphi 0, %s40
      %s41 = sphi 0, %s38
      %s42 = sphi 0, %s41
      %s58 = sphi 0, %s42
      %s66 = sphi 0, %s68
      %s69 = sphi 0, %s66
      %s70 = sphi 0, %s69
      %s86 = sphi 0, %s70
      %s92 = sphi 0, %s94
      %s95 = sphi 0, %s92
      %s96 = sphi 0, %s95
      %s112 = sphi 0, %s96
      %s118 = sphi 0, %s120
      %s121 = sphi 0, %s118
      %s122 = sphi 0, %s121
      %s138 = sphi 0, %s122
    $region4: #{tpu_custom_call.1} parent=1 // loop_header_branch
      %19 = sbr.rel (%p17) target = $region8
    $region5: #{tpu_custom_call.1} parent=1 // loop_body
      %s21 = ssub.s32 %s16, 1
      %s22 = ssub.s32 %s16, 2
      %s29 = sadd.s32 1, %s24
      %p30 = scmp.ge.s32.totalorder %s29, 1
      %s31 = scalar_select %p30, 0, %s29
      %s32 = sadd.s32 1, %s23
      %s33 = scalar_select %p30, %s32, %s23
      %p34 = scmp.ge.s32.totalorder %s33, 2
      %s35 = scalar_select %p34, 0, %s33
      %s36 = ssub.s32 %s24, %s31
      %p37 = scmp.eq.s32.totalorder %s36, 0
      %s39 = sadd.s32 %s38, 1
      %s40 = scalar_select %p37, %s38, %s39
      %p43 = pneg %p37
      %p44 = scmp.eq.s32.totalorder %s16, 1
      %p45 = por %p43, %p44
      %p46 = scmp.ne.s32.totalorder %s38, %s41
      %p47 = scmp.eq.s32.totalorder %s16, 0
      %p48 = por %p46, %p47
      %p49 = scmp.ne.s32.totalorder %s38, %s41
      %p50 = scmp.eq.s32.totalorder %s21, 1
      %p51 = por %p49, %p50
      %p52 = scmp.ne.s32.totalorder %s41, %s42
      %p53 = scmp.eq.s32.totalorder %s21, 0
      %p54 = por %p52, %p53
      %p55 = scmp.ne.s32.totalorder %s41, %s42
      %p56 = scmp.eq.s32.totalorder %s22, 1
      %p57 = por %p55, %p56
      %p59 = scmp.ne.s32.totalorder %s42, %s58
      %p60 = scmp.eq.s32.totalorder %s22, 0
      %p61 = por %p59, %p60
      %s62 = ssub.s32 %s24, %s31
      %s63 = ssub.s32 %s23, %s35
      %s64 = sor.u32 %s62, %s63
      %p65 = scmp.eq.s32.totalorder %s64, 0
      %s67 = sadd.s32 %s66, 1
      %s68 = scalar_select %p65, %s66, %s67
      %p71 = pneg %p65
      %p72 = scmp.eq.s32.totalorder %s16, 1
      %p73 = por %p71, %p72
      %p74 = scmp.ne.s32.totalorder %s66, %s69
      %p75 = scmp.eq.s32.totalorder %s16, 0
      %p76 = por %p74, %p75
      %p77 = scmp.ne.s32.totalorder %s66, %s69
      %p78 = scmp.eq.s32.totalorder %s21, 1
      %p79 = por %p77, %p78
      %p80 = scmp.ne.s32.totalorder %s69, %s70
      %p81 = scmp.eq.s32.totalorder %s21, 0
      %p82 = por %p80, %p81
      %p83 = scmp.ne.s32.totalorder %s69, %s70
      %p84 = scmp.eq.s32.totalorder %s22, 1
      %p85 = por %p83, %p84
      %p87 = scmp.ne.s32.totalorder %s70, %s86
      %p88 = scmp.eq.s32.totalorder %s22, 0
      %p89 = por %p87, %p88
      %s90 = ssub.s32 %s23, %s35
      %p91 = scmp.eq.s32.totalorder %s90, 0
      %s93 = sadd.s32 %s92, 1
      %s94 = scalar_select %p91, %s92, %s93
      %p97 = pneg %p91
      %p98 = scmp.eq.s32.totalorder %s16, 1
      %p99 = por %p97, %p98
      %p100 = scmp.ne.s32.totalorder %s92, %s95
      %p101 = scmp.eq.s32.totalorder %s16, 0
      %p102 = por %p100, %p101
      %p103 = scmp.ne.s32.totalorder %s92, %s95
      %p104 = scmp.eq.s32.totalorder %s21, 1
      %p105 = por %p103, %p104
      %p106 = scmp.ne.s32.totalorder %s95, %s96
      %p107 = scmp.eq.s32.totalorder %s21, 0
      %p108 = por %p106, %p107
      %p109 = scmp.ne.s32.totalorder %s95, %s96
      %p110 = scmp.eq.s32.totalorder %s22, 1
      %p111 = por %p109, %p110
      %p113 = scmp.ne.s32.totalorder %s96, %s112
      %p114 = scmp.eq.s32.totalorder %s22, 0
      %p115 = por %p113, %p114
      %s116 = ssub.s32 %s23, %s35
      %p117 = scmp.eq.s32.totalorder %s116, 0
      %s119 = sadd.s32 %s118, 1
      %s120 = scalar_select %p117, %s118, %s119
      %p123 = pneg %p117
      %p124 = scmp.eq.s32.totalorder %s16, 1
      %p125 = por %p123, %p124
      %p126 = scmp.ne.s32.totalorder %s118, %s121
      %p127 = scmp.eq.s32.totalorder %s16, 0
      %p128 = por %p126, %p127
      %p129 = scmp.ne.s32.totalorder %s118, %s121
      %p130 = scmp.eq.s32.totalorder %s21, 1
      %p131 = por %p129, %p130
      %p132 = scmp.ne.s32.totalorder %s121, %s122
      %p133 = scmp.eq.s32.totalorder %s21, 0
      %p134 = por %p132, %p133
      %p135 = scmp.ne.s32.totalorder %s121, %s122
      %p136 = scmp.eq.s32.totalorder %s22, 1
      %p137 = por %p135, %p136
      %p139 = scmp.ne.s32.totalorder %s122, %s138
      %p140 = scmp.eq.s32.totalorder %s22, 0
      %p141 = por %p139, %p140
      %p142 = scmp.le.s32.totalorder 1, %s16
      %p143 = scmp.lt.s32.totalorder %s16, 3
      %p144 = pnand %p142, %p143
      %p145 = pneg %p144
      // Predicated region
      $region9: #{tpu_custom_call.1} parent=5 // pred_check
        _
      $region10: #{tpu_custom_call.1} parent=5 // pred_check_branch
        %147 = sbr.rel (%p144) target = $region12
      $region11: #{tpu_custom_call.1} parent=5 // pred_region
        %s148 = ssub.s32 %s16, 1
        // Predicated region
        $region13: #{tpu_custom_call.1} parent=11 // pred_check
          %p149 = pneg %p54
        $region14: #{tpu_custom_call.1} parent=11 // pred_check_branch
          %151 = sbr.rel (%p149) target = $region16
        $region15: #{tpu_custom_call.1} parent=11 // pred_region
          %s152 = smul.u32 4, %s26
          %s154 = ssub.s32 256, 256
          %155 = vsyncadd [#allocation4], %s154
          %s156 = smul.addr %s152, 64
          %s157 = scalar_lea.hbm %s0, %s156
          %s159 = sshll.u32 [#allocation3], 4
          %s160 = int_to_ptr.vmem [resolvable:$true] %s159
          %162 = dma.hbm_to_vmem [thread:$0]  %s157, 256, %s160, [#allocation4]
        $region16: #{tpu_custom_call.1} parent=11 // pred_fallthru
          _
      $region12: #{tpu_custom_call.1} parent=5 // pred_fallthru
        _
      %p163 = scmp.lt.s32.totalorder %s16, 2
      // Predicated region
      $region17: #{tpu_custom_call.1} parent=5 // pred_check
        %p164 = pneg %p163
      $region18: #{tpu_custom_call.1} parent=5 // pred_check_branch
        %166 = sbr.rel (%p164) target = $region20
      $region19: #{tpu_custom_call.1} parent=5 // pred_region
        // Predicated region
        $region21: #{tpu_custom_call.1} parent=19 // pred_check
          %p167 = pneg %p76
        $region22: #{tpu_custom_call.1} parent=19 // pred_check_branch
          %169 = sbr.rel (%p167) target = $region24
        $region23: #{tpu_custom_call.1} parent=19 // pred_region
          %s170 = sand.u32 %s16, 1
          %s171 = scalar_lea.sflag [#allocation7], %s170
          %s172 = sand.u32 %s66, 1
          %s173 = smul.addr %s172, 1024
          %s174 = scalar_lea.vmem [#allocation6], %s173
          %s175 = smul.u32 64, %s24
          %s176 = smul.u32 4, %s23
          %s178 = ssub.s32 16384, 16384
          %179 = vsyncadd %s171, %s178
          %s180 = smul.addr %s175, 8
          %s181 = sadd.s32 %s176, %s180
          %s182 = smul.addr %s181, 64
          %s183 = scalar_lea.hbm %s1, %s182
          %s184 = sshll.u32 %s174, 4
          %s185 = int_to_ptr.vmem [resolvable:$true] %s184
          %190 = dma.hbm_to_vmem [thread:$0]  %s183, 16384, %s185, %s171, 512, 256, 16
        $region24: #{tpu_custom_call.1} parent=19 // pred_fallthru
          _
        // Predicated region
        $region25: #{tpu_custom_call.1} parent=19 // pred_check
          %p191 = pneg %p102
        $region26: #{tpu_custom_call.1} parent=19 // pred_check_branch
          %193 = sbr.rel (%p191) target = $region28
        $region27: #{tpu_custom_call.1} parent=19 // pred_region
          %s194 = sand.u32 %s16, 1
          %s195 = scalar_lea.sflag [#allocation7], %s194
          %s196 = sand.u32 %s92, 1
          %s197 = smul.addr %s196, 32
          %s198 = scalar_lea.vmem [#allocation8], %s197
          %s199 = smul.u32 4, %s23
          %s201 = ssub.s32 512, 512
          %202 = vsyncadd %s195, %s201
          %s203 = smul.addr %s199, 128
          %s204 = scalar_lea.hbm %s2, %s203
          %s206 = sshll.u32 %s198, 4
          %s207 = int_to_ptr.vmem [resolvable:$true] %s206
          %209 = dma.hbm_to_vmem [thread:$0]  %s204, 512, %s207, %s195
        $region28: #{tpu_custom_call.1} parent=19 // pred_fallthru
          _
      $region20: #{tpu_custom_call.1} parent=5 // pred_fallthru
        _
      %p210 = scmp.le.s32.totalorder 1, %s16
      %p211 = scmp.lt.s32.totalorder %s16, 3
      %p212 = pnand %p210, %p211
      %p213 = pneg %p212
      // Predicated region
      $region29: #{tpu_custom_call.1} parent=5 // pred_check
        _
      $region30: #{tpu_custom_call.1} parent=5 // pred_check_branch
        %215 = sbr.rel (%p212) target = $region32
      $region31: #{tpu_custom_call.1} parent=5 // pred_region
        %s216 = ssub.s32 %s16, 1
        // Predicated region
        $region33: #{tpu_custom_call.1} parent=31 // pred_check
          %p217 = pneg %p54
        $region34: #{tpu_custom_call.1} parent=31 // pred_check_branch
          %219 = sbr.rel (%p217) target = $region36
        $region35: #{tpu_custom_call.1} parent=31 // pred_region
          %220 = dma.done [#allocation4], 256
        $region36: #{tpu_custom_call.1} parent=31 // pred_fallthru
          _
        %s221 = sand.u32 %s21, 1
        %s222 = scalar_lea.sflag [#allocation7], %s221
        %s223 = sand.u32 %s69, 1
        %s224 = smul.addr %s223, 1024
        %s225 = scalar_lea.vmem [#allocation6], %s224
        // Predicated region
        $region37: #{tpu_custom_call.1} parent=31 // pred_check
          %p226 = pneg %p82
        $region38: #{tpu_custom_call.1} parent=31 // pred_check_branch
          %228 = sbr.rel (%p226) target = $region40
        $region39: #{tpu_custom_call.1} parent=31 // pred_region
          %229 = dma.done %s222, 16384
        $region40: #{tpu_custom_call.1} parent=31 // pred_fallthru
          _
        %s230 = sand.u32 %s21, 1
        %s231 = scalar_lea.sflag [#allocation7], %s230
        %s232 = sand.u32 %s95, 1
        %s233 = smul.addr %s232, 32
        %s234 = scalar_lea.vmem [#allocation8], %s233
        // Predicated region
        $region41: #{tpu_custom_call.1} parent=31 // pred_check
          %p235 = pneg %p108
        $region42: #{tpu_custom_call.1} parent=31 // pred_check_branch
          %237 = sbr.rel (%p235) target = $region44
        $region43: #{tpu_custom_call.1} parent=31 // pred_region
          %238 = dma.done %s231, 512
        $region44: #{tpu_custom_call.1} parent=31 // pred_fallthru
          _
        %p239 = pneg %p54
        %p240 = pneg %p51
        %s241 = sand.u32 %s21, 1
        %s242 = scalar_lea.sflag [#allocation7], %s241
        %s243 = sand.u32 %s69, 1
        %s244 = smul.addr %s243, 1024
        %s245 = scalar_lea.vmem [#allocation6], %s244
        %p246 = pneg %p82
        %p247 = pneg %p79
        %s248 = sand.u32 %s21, 1
        %s249 = scalar_lea.sflag [#allocation7], %s248
        %s250 = sand.u32 %s95, 1
        %s251 = smul.addr %s250, 32
        %s252 = scalar_lea.vmem [#allocation8], %s251
        %p253 = pneg %p108
        %p254 = pneg %p105
        %p255 = pneg %p134
        %p256 = pneg %p131
        %s257 = sand.u32 %s121, 1
        %s258 = scalar_lea.sflag [#allocation5], %s257
        %s259 = sand.u32 %s121, 1
        %s260 = smul.addr %s259, 16
        %s261 = scalar_lea.vmem [#allocation9], %s260
        %s262 = smul.u32 4, %s26
        %s263 = smul.u32 64, %s26
        %s264 = smul.u32 4, %s25
        %s265 = smul.u32 4, %s25
        %s266 = smul.u32 4, %s25
        %p267 = scmp.eq.s32.totalorder %s26, 0
        // Predicated region
        $region45: #{tpu_custom_call.1} parent=31 // pred_check
          %p268 = pneg %p267
        $region46: #{tpu_custom_call.1} parent=31 // pred_check_branch
          %270 = sbr.rel (%p268) target = $region48
        $region47: #{tpu_custom_call.1} parent=31 // pred_region
          %271 = vst [vmem:[#allocation2] sm:$0xff] 0.0
          %272 = vst [vmem:[#allocation2 + $0x8] sm:$0xff] 0.0
          %273 = vst [vmem:[#allocation2 + $0x10] sm:$0xff] 0.0
          %274 = vst [vmem:[#allocation2 + $0x18] sm:$0xff] 0.0
        $region48: #{tpu_custom_call.1} parent=31 // pred_fallthru
          _
        %v275 = vld [vmem:[#allocation2] sm:$0xff]
        %v276 = vld [vmem:[#allocation2 + $0x8] sm:$0xff]
        %v277 = vld [vmem:[#allocation2 + $0x10] sm:$0xff]
        %v278 = vld [vmem:[#allocation2 + $0x18] sm:$0xff]
        %v279 = vld [vmem:[#allocation3] sm:$0xff]
        %v280 = vld [vmem:[#allocation3 + $0x8] sm:$0xff]
        %v281 = vld [vmem:[%s225] sm:$0xff]
        %v282 = vld [vmem:[%s225 + $0x8] sm:$0xff]
        %v283 = vld [vmem:[%s225 + $0x10] sm:$0xff]
        %v284 = vld [vmem:[%s225 + $0x18] sm:$0xff]
        %v285 = vld [vmem:[%s225 + $0x20] sm:$0xff]
        %v286 = vld [vmem:[%s225 + $0x28] sm:$0xff]
        %v287 = vld [vmem:[%s225 + $0x30] sm:$0xff]
        %v288 = vld [vmem:[%s225 + $0x38] sm:$0xff]
        %v289 = vld [vmem:[%s225 + $0x40] sm:$0xff]
        %v290 = vld [vmem:[%s225 + $0x48] sm:$0xff]
        %v291 = vld [vmem:[%s225 + $0x50] sm:$0xff]
        %v292 = vld [vmem:[%s225 + $0x58] sm:$0xff]
        %v293 = vld [vmem:[%s225 + $0x60] sm:$0xff]
        %v294 = vld [vmem:[%s225 + $0x68] sm:$0xff]
        %v295 = vld [vmem:[%s225 + $0x70] sm:$0xff]
        %v296 = vld [vmem:[%s225 + $0x78] sm:$0xff]
        %v297 = vld [vmem:[%s225 + $0x80] sm:$0xff]
        %v298 = vld [vmem:[%s225 + $0x88] sm:$0xff]
        %v299 = vld [vmem:[%s225 + $0x90] sm:$0xff]
        %v300 = vld [vmem:[%s225 + $0x98] sm:$0xff]
        %v301 = vld [vmem:[%s225 + $0xa0] sm:$0xff]
        %v302 = vld [vmem:[%s225 + $0xa8] sm:$0xff]
        %v303 = vld [vmem:[%s225 + $0xb0] sm:$0xff]
        %v304 = vld [vmem:[%s225 + $0xb8] sm:$0xff]
        %v305 = vld [vmem:[%s225 + $0xc0] sm:$0xff]
        %v306 = vld [vmem:[%s225 + $0xc8] sm:$0xff]
        %v307 = vld [vmem:[%s225 + $0xd0] sm:$0xff]
        %v308 = vld [vmem:[%s225 + $0xd8] sm:$0xff]
        %v309 = vld [vmem:[%s225 + $0xe0] sm:$0xff]
        %v310 = vld [vmem:[%s225 + $0xe8] sm:$0xff]
        %v311 = vld [vmem:[%s225 + $0xf0] sm:$0xff]
        %v312 = vld [vmem:[%s225 + $0xf8] sm:$0xff]
        %v313 = vld [vmem:[%s225 + $0x100] sm:$0xff]
        %v314 = vld [vmem:[%s225 + $0x108] sm:$0xff]
        %v315 = vld [vmem:[%s225 + $0x110] sm:$0xff]
        %v316 = vld [vmem:[%s225 + $0x118] sm:$0xff]
        %v317 = vld [vmem:[%s225 + $0x120] sm:$0xff]
        %v318 = vld [vmem:[%s225 + $0x128] sm:$0xff]
        %v319 = vld [vmem:[%s225 + $0x130] sm:$0xff]
        %v320 = vld [vmem:[%s225 + $0x138] sm:$0xff]
        %v321 = vld [vmem:[%s225 + $0x140] sm:$0xff]
        %v322 = vld [vmem:[%s225 + $0x148] sm:$0xff]
        %v323 = vld [vmem:[%s225 + $0x150] sm:$0xff]
        %v324 = vld [vmem:[%s225 + $0x158] sm:$0xff]
        %v325 = vld [vmem:[%s225 + $0x160] sm:$0xff]
        %v326 = vld [vmem:[%s225 + $0x168] sm:$0xff]
        %v327 = vld [vmem:[%s225 + $0x170] sm:$0xff]
        %v328 = vld [vmem:[%s225 + $0x178] sm:$0xff]
        %v329 = vld [vmem:[%s225 + $0x180] sm:$0xff]
        %v330 = vld [vmem:[%s225 + $0x188] sm:$0xff]
        %v331 = vld [vmem:[%s225 + $0x190] sm:$0xff]
        %v332 = vld [vmem:[%s225 + $0x198] sm:$0xff]
        %v333 = vld [vmem:[%s225 + $0x1a0] sm:$0xff]
        %v334 = vld [vmem:[%s225 + $0x1a8] sm:$0xff]
        %v335 = vld [vmem:[%s225 + $0x1b0] sm:$0xff]
        %v336 = vld [vmem:[%s225 + $0x1b8] sm:$0xff]
        %v337 = vld [vmem:[%s225 + $0x1c0] sm:$0xff]
        %v338 = vld [vmem:[%s225 + $0x1c8] sm:$0xff]
        %v339 = vld [vmem:[%s225 + $0x1d0] sm:$0xff]
        %v340 = vld [vmem:[%s225 + $0x1d8] sm:$0xff]
        %v341 = vld [vmem:[%s225 + $0x1e0] sm:$0xff]
        %v342 = vld [vmem:[%s225 + $0x1e8] sm:$0xff]
        %v343 = vld [vmem:[%s225 + $0x1f0] sm:$0xff]
        %v344 = vld [vmem:[%s225 + $0x1f8] sm:$0xff]
        %v345 = vld [vmem:[%s225 + $0x200] sm:$0xff]
        %v346 = vld [vmem:[%s225 + $0x208] sm:$0xff]
        %v347 = vld [vmem:[%s225 + $0x210] sm:$0xff]
        %v348 = vld [vmem:[%s225 + $0x218] sm:$0xff]
        %v349 = vld [vmem:[%s225 + $0x220] sm:$0xff]
        %v350 = vld [vmem:[%s225 + $0x228] sm:$0xff]
        %v351 = vld [vmem:[%s225 + $0x230] sm:$0xff]
        %v352 = vld [vmem:[%s225 + $0x238] sm:$0xff]
        %v353 = vld [vmem:[%s225 + $0x240] sm:$0xff]
        %v354 = vld [vmem:[%s225 + $0x248] sm:$0xff]
        %v355 = vld [vmem:[%s225 + $0x250] sm:$0xff]
        %v356 = vld [vmem:[%s225 + $0x258] sm:$0xff]
        %v357 = vld [vmem:[%s225 + $0x260] sm:$0xff]
        %v358 = vld [vmem:[%s225 + $0x268] sm:$0xff]
        %v359 = vld [vmem:[%s225 + $0x270] sm:$0xff]
        %v360 = vld [vmem:[%s225 + $0x278] sm:$0xff]
        %v361 = vld [vmem:[%s225 + $0x280] sm:$0xff]
        %v362 = vld [vmem:[%s225 + $0x288] sm:$0xff]
        %v363 = vld [vmem:[%s225 + $0x290] sm:$0xff]
        %v364 = vld [vmem:[%s225 + $0x298] sm:$0xff]
        %v365 = vld [vmem:[%s225 + $0x2a0] sm:$0xff]
        %v366 = vld [vmem:[%s225 + $0x2a8] sm:$0xff]
        %v367 = vld [vmem:[%s225 + $0x2b0] sm:$0xff]
        %v368 = vld [vmem:[%s225 + $0x2b8] sm:$0xff]
        %v369 = vld [vmem:[%s225 + $0x2c0] sm:$0xff]
        %v370 = vld [vmem:[%s225 + $0x2c8] sm:$0xff]
        %v371 = vld [vmem:[%s225 + $0x2d0] sm:$0xff]
        %v372 = vld [vmem:[%s225 + $0x2d8] sm:$0xff]
        %v373 = vld [vmem:[%s225 + $0x2e0] sm:$0xff]
        %v374 = vld [vmem:[%s225 + $0x2e8] sm:$0xff]
        %v375 = vld [vmem:[%s225 + $0x2f0] sm:$0xff]
        %v376 = vld [vmem:[%s225 + $0x2f8] sm:$0xff]
        %v377 = vld [vmem:[%s225 + $0x300] sm:$0xff]
        %v378 = vld [vmem:[%s225 + $0x308] sm:$0xff]
        %v379 = vld [vmem:[%s225 + $0x310] sm:$0xff]
        %v380 = vld [vmem:[%s225 + $0x318] sm:$0xff]
        %v381 = vld [vmem:[%s225 + $0x320] sm:$0xff]
        %v382 = vld [vmem:[%s225 + $0x328] sm:$0xff]
        %v383 = vld [vmem:[%s225 + $0x330] sm:$0xff]
        %v384 = vld [vmem:[%s225 + $0x338] sm:$0xff]
        %v385 = vld [vmem:[%s225 + $0x340] sm:$0xff]
        %v386 = vld [vmem:[%s225 + $0x348] sm:$0xff]
        %v387 = vld [vmem:[%s225 + $0x350] sm:$0xff]
        %v388 = vld [vmem:[%s225 + $0x358] sm:$0xff]
        %v389 = vld [vmem:[%s225 + $0x360] sm:$0xff]
        %v390 = vld [vmem:[%s225 + $0x368] sm:$0xff]
        %v391 = vld [vmem:[%s225 + $0x370] sm:$0xff]
        %v392 = vld [vmem:[%s225 + $0x378] sm:$0xff]
        %v393 = vld [vmem:[%s225 + $0x380] sm:$0xff]
        %v394 = vld [vmem:[%s225 + $0x388] sm:$0xff]
        %v395 = vld [vmem:[%s225 + $0x390] sm:$0xff]
        %v396 = vld [vmem:[%s225 + $0x398] sm:$0xff]
        %v397 = vld [vmem:[%s225 + $0x3a0] sm:$0xff]
        %v398 = vld [vmem:[%s225 + $0x3a8] sm:$0xff]
        %v399 = vld [vmem:[%s225 + $0x3b0] sm:$0xff]
        %v400 = vld [vmem:[%s225 + $0x3b8] sm:$0xff]
        %v401 = vld [vmem:[%s225 + $0x3c0] sm:$0xff]
        %v402 = vld [vmem:[%s225 + $0x3c8] sm:$0xff]
        %v403 = vld [vmem:[%s225 + $0x3d0] sm:$0xff]
        %v404 = vld [vmem:[%s225 + $0x3d8] sm:$0xff]
        %v405 = vld [vmem:[%s225 + $0x3e0] sm:$0xff]
        %v406 = vld [vmem:[%s225 + $0x3e8] sm:$0xff]
        %v407 = vld [vmem:[%s225 + $0x3f0] sm:$0xff]
        %v408 = vld [vmem:[%s225 + $0x3f8] sm:$0xff]
        %v411 = vunpack.c.l.b16 %v279
        %v412 = vunpack.c.h.b16 %v279
        %v413 = vunpack.c.l.b16 %v280
        %v414 = vunpack.c.h.b16 %v280
        %v415 = vpack.c.b16 %v411, %v411
        %v416 = vpack.c.b16 %v412, %v412
        %v417 = vpack.c.b16 %v413, %v413
        %v418 = vpack.c.b16 %v414, %v414
        %v551 = vunpack.c.l.b16 %v281
        %v552 = vunpack.c.h.b16 %v281
        %v553 = vunpack.c.l.b16 %v282
        %v554 = vunpack.c.h.b16 %v282
        %v555 = vunpack.c.l.b16 %v283
        %v556 = vunpack.c.h.b16 %v283
        %v557 = vunpack.c.l.b16 %v284
        %v558 = vunpack.c.h.b16 %v284
        %v559 = vunpack.c.l.b16 %v285
        %v560 = vunpack.c.h.b16 %v285
        %v561 = vunpack.c.l.b16 %v286
        %v562 = vunpack.c.h.b16 %v286
        %v563 = vunpack.c.l.b16 %v287
        %v564 = vunpack.c.h.b16 %v287
        %v565 = vunpack.c.l.b16 %v288
        %v566 = vunpack.c.h.b16 %v288
        %v567 = vunpack.c.l.b16 %v289
        %v568 = vunpack.c.h.b16 %v289
        %v569 = vunpack.c.l.b16 %v290
        %v570 = vunpack.c.h.b16 %v290
        %v571 = vunpack.c.l.b16 %v291
        %v572 = vunpack.c.h.b16 %v291
        %v573 = vunpack.c.l.b16 %v292
        %v574 = vunpack.c.h.b16 %v292
        %v575 = vunpack.c.l.b16 %v293
        %v576 = vunpack.c.h.b16 %v293
        %v577 = vunpack.c.l.b16 %v294
        %v578 = vunpack.c.h.b16 %v294
        %v579 = vunpack.c.l.b16 %v295
        %v580 = vunpack.c.h.b16 %v295
        %v581 = vunpack.c.l.b16 %v296
        %v582 = vunpack.c.h.b16 %v296
        %v583 = vunpack.c.l.b16 %v297
        %v584 = vunpack.c.h.b16 %v297
        %v585 = vunpack.c.l.b16 %v298
        %v586 = vunpack.c.h.b16 %v298
        %v587 = vunpack.c.l.b16 %v299
        %v588 = vunpack.c.h.b16 %v299
        %v589 = vunpack.c.l.b16 %v300
        %v590 = vunpack.c.h.b16 %v300
        %v591 = vunpack.c.l.b16 %v301
        %v592 = vunpack.c.h.b16 %v301
        %v593 = vunpack.c.l.b16 %v302
        %v594 = vunpack.c.h.b16 %v302
        %v595 = vunpack.c.l.b16 %v303
        %v596 = vunpack.c.h.b16 %v303
        %v597 = vunpack.c.l.b16 %v304
        %v598 = vunpack.c.h.b16 %v304
        %v599 = vunpack.c.l.b16 %v305
        %v600 = vunpack.c.h.b16 %v305
        %v601 = vunpack.c.l.b16 %v306
        %v602 = vunpack.c.h.b16 %v306
        %v603 = vunpack.c.l.b16 %v307
        %v604 = vunpack.c.h.b16 %v307
        %v605 = vunpack.c.l.b16 %v308
        %v606 = vunpack.c.h.b16 %v308
        %v607 = vunpack.c.l.b16 %v309
        %v608 = vunpack.c.h.b16 %v309
        %v609 = vunpack.c.l.b16 %v310
        %v610 = vunpack.c.h.b16 %v310
        %v611 = vunpack.c.l.b16 %v311
        %v612 = vunpack.c.h.b16 %v311
        %v613 = vunpack.c.l.b16 %v312
        %v614 = vunpack.c.h.b16 %v312
        %v615 = vunpack.c.l.b16 %v313
        %v616 = vunpack.c.h.b16 %v313
        %v617 = vunpack.c.l.b16 %v314
        %v618 = vunpack.c.h.b16 %v314
        %v619 = vunpack.c.l.b16 %v315
        %v620 = vunpack.c.h.b16 %v315
        %v621 = vunpack.c.l.b16 %v316
        %v622 = vunpack.c.h.b16 %v316
        %v623 = vunpack.c.l.b16 %v317
        %v624 = vunpack.c.h.b16 %v317
        %v625 = vunpack.c.l.b16 %v318
        %v626 = vunpack.c.h.b16 %v318
        %v627 = vunpack.c.l.b16 %v319
        %v628 = vunpack.c.h.b16 %v319
        %v629 = vunpack.c.l.b16 %v320
        %v630 = vunpack.c.h.b16 %v320
        %v631 = vunpack.c.l.b16 %v321
        %v632 = vunpack.c.h.b16 %v321
        %v633 = vunpack.c.l.b16 %v322
        %v634 = vunpack.c.h.b16 %v322
        %v635 = vunpack.c.l.b16 %v323
        %v636 = vunpack.c.h.b16 %v323
        %v637 = vunpack.c.l.b16 %v324
        %v638 = vunpack.c.h.b16 %v324
        %v639 = vunpack.c.l.b16 %v325
        %v640 = vunpack.c.h.b16 %v325
        %v641 = vunpack.c.l.b16 %v326
        %v642 = vunpack.c.h.b16 %v326
        %v643 = vunpack.c.l.b16 %v327
        %v644 = vunpack.c.h.b16 %v327
        %v645 = vunpack.c.l.b16 %v328
        %v646 = vunpack.c.h.b16 %v328
        %v647 = vunpack.c.l.b16 %v329
        %v648 = vunpack.c.h.b16 %v329
        %v649 = vunpack.c.l.b16 %v330
        %v650 = vunpack.c.h.b16 %v330
        %v651 = vunpack.c.l.b16 %v331
        %v652 = vunpack.c.h.b16 %v331
        %v653 = vunpack.c.l.b16 %v332
        %v654 = vunpack.c.h.b16 %v332
        %v655 = vunpack.c.l.b16 %v333
        %v656 = vunpack.c.h.b16 %v333
        %v657 = vunpack.c.l.b16 %v334
        %v658 = vunpack.c.h.b16 %v334
        %v659 = vunpack.c.l.b16 %v335
        %v660 = vunpack.c.h.b16 %v335
        %v661 = vunpack.c.l.b16 %v336
        %v662 = vunpack.c.h.b16 %v336
        %v663 = vunpack.c.l.b16 %v337
        %v664 = vunpack.c.h.b16 %v337
        %v665 = vunpack.c.l.b16 %v338
        %v666 = vunpack.c.h.b16 %v338
        %v667 = vunpack.c.l.b16 %v339
        %v668 = vunpack.c.h.b16 %v339
        %v669 = vunpack.c.l.b16 %v340
        %v670 = vunpack.c.h.b16 %v340
        %v671 = vunpack.c.l.b16 %v341
        %v672 = vunpack.c.h.b16 %v341
        %v673 = vunpack.c.l.b16 %v342
        %v674 = vunpack.c.h.b16 %v342
        %v675 = vunpack.c.l.b16 %v343
        %v676 = vunpack.c.h.b16 %v343
        %v677 = vunpack.c.l.b16 %v344
        %v678 = vunpack.c.h.b16 %v344
        %v679 = vunpack.c.l.b16 %v345
        %v680 = vunpack.c.h.b16 %v345
        %v681 = vunpack.c.l.b16 %v346
        %v682 = vunpack.c.h.b16 %v346
        %v683 = vunpack.c.l.b16 %v347
        %v684 = vunpack.c.h.b16 %v347
        %v685 = vunpack.c.l.b16 %v348
        %v686 = vunpack.c.h.b16 %v348
        %v687 = vunpack.c.l.b16 %v349
        %v688 = vunpack.c.h.b16 %v349
        %v689 = vunpack.c.l.b16 %v350
        %v690 = vunpack.c.h.b16 %v350
        %v691 = vunpack.c.l.b16 %v351
        %v692 = vunpack.c.h.b16 %v351
        %v693 = vunpack.c.l.b16 %v352
        %v694 = vunpack.c.h.b16 %v352
        %v695 = vunpack.c.l.b16 %v353
        %v696 = vunpack.c.h.b16 %v353
        %v697 = vunpack.c.l.b16 %v354
        %v698 = vunpack.c.h.b16 %v354
        %v699 = vunpack.c.l.b16 %v355
        %v700 = vunpack.c.h.b16 %v355
        %v701 = vunpack.c.l.b16 %v356
        %v702 = vunpack.c.h.b16 %v356
        %v703 = vunpack.c.l.b16 %v357
        %v704 = vunpack.c.h.b16 %v357
        %v705 = vunpack.c.l.b16 %v358
        %v706 = vunpack.c.h.b16 %v358
        %v707 = vunpack.c.l.b16 %v359
        %v708 = vunpack.c.h.b16 %v359
        %v709 = vunpack.c.l.b16 %v360
        %v710 = vunpack.c.h.b16 %v360
        %v711 = vunpack.c.l.b16 %v361
        %v712 = vunpack.c.h.b16 %v361
        %v713 = vunpack.c.l.b16 %v362
        %v714 = vunpack.c.h.b16 %v362
        %v715 = vunpack.c.l.b16 %v363
        %v716 = vunpack.c.h.b16 %v363
        %v717 = vunpack.c.l.b16 %v364
        %v718 = vunpack.c.h.b16 %v364
        %v719 = vunpack.c.l.b16 %v365
        %v720 = vunpack.c.h.b16 %v365
        %v721 = vunpack.c.l.b16 %v366
        %v722 = vunpack.c.h.b16 %v366
        %v723 = vunpack.c.l.b16 %v367
        %v724 = vunpack.c.h.b16 %v367
        %v725 = vunpack.c.l.b16 %v368
        %v726 = vunpack.c.h.b16 %v368
        %v727 = vunpack.c.l.b16 %v369
        %v728 = vunpack.c.h.b16 %v369
        %v729 = vunpack.c.l.b16 %v370
        %v730 = vunpack.c.h.b16 %v370
        %v731 = vunpack.c.l.b16 %v371
        %v732 = vunpack.c.h.b16 %v371
        %v733 = vunpack.c.l.b16 %v372
        %v734 = vunpack.c.h.b16 %v372
        %v735 = vunpack.c.l.b16 %v373
        %v736 = vunpack.c.h.b16 %v373
        %v737 = vunpack.c.l.b16 %v374
        %v738 = vunpack.c.h.b16 %v374
        %v739 = vunpack.c.l.b16 %v375
        %v740 = vunpack.c.h.b16 %v375
        %v741 = vunpack.c.l.b16 %v376
        %v742 = vunpack.c.h.b16 %v376
        %v743 = vunpack.c.l.b16 %v377
        %v744 = vunpack.c.h.b16 %v377
        %v745 = vunpack.c.l.b16 %v378
        %v746 = vunpack.c.h.b16 %v378
        %v747 = vunpack.c.l.b16 %v379
        %v748 = vunpack.c.h.b16 %v379
        %v749 = vunpack.c.l.b16 %v380
        %v750 = vunpack.c.h.b16 %v380
        %v751 = vunpack.c.l.b16 %v381
        %v752 = vunpack.c.h.b16 %v381
        %v753 = vunpack.c.l.b16 %v382
        %v754 = vunpack.c.h.b16 %v382
        %v755 = vunpack.c.l.b16 %v383
        %v756 = vunpack.c.h.b16 %v383
        %v757 = vunpack.c.l.b16 %v384
        %v758 = vunpack.c.h.b16 %v384
        %v759 = vunpack.c.l.b16 %v385
        %v760 = vunpack.c.h.b16 %v385
        %v761 = vunpack.c.l.b16 %v386
        %v762 = vunpack.c.h.b16 %v386
        %v763 = vunpack.c.l.b16 %v387
        %v764 = vunpack.c.h.b16 %v387
        %v765 = vunpack.c.l.b16 %v388
        %v766 = vunpack.c.h.b16 %v388
        %v767 = vunpack.c.l.b16 %v389
        %v768 = vunpack.c.h.b16 %v389
        %v769 = vunpack.c.l.b16 %v390
        %v770 = vunpack.c.h.b16 %v390
        %v771 = vunpack.c.l.b16 %v391
        %v772 = vunpack.c.h.b16 %v391
        %v773 = vunpack.c.l.b16 %v392
        %v774 = vunpack.c.h.b16 %v392
        %v775 = vunpack.c.l.b16 %v393
        %v776 = vunpack.c.h.b16 %v393
        %v777 = vunpack.c.l.b16 %v394
        %v778 = vunpack.c.h.b16 %v394
        %v779 = vunpack.c.l.b16 %v395
        %v780 = vunpack.c.h.b16 %v395
        %v781 = vunpack.c.l.b16 %v396
        %v782 = vunpack.c.h.b16 %v396
        %v783 = vunpack.c.l.b16 %v397
        %v784 = vunpack.c.h.b16 %v397
        %v785 = vunpack.c.l.b16 %v398
        %v786 = vunpack.c.h.b16 %v398
        %v787 = vunpack.c.l.b16 %v399
        %v788 = vunpack.c.h.b16 %v399
        %v789 = vunpack.c.l.b16 %v400
        %v790 = vunpack.c.h.b16 %v400
        %v791 = vunpack.c.l.b16 %v401
        %v792 = vunpack.c.h.b16 %v401
        %v793 = vunpack.c.l.b16 %v402
        %v794 = vunpack.c.h.b16 %v402
        %v795 = vunpack.c.l.b16 %v403
        %v796 = vunpack.c.h.b16 %v403
        %v797 = vunpack.c.l.b16 %v404
        %v798 = vunpack.c.h.b16 %v404
        %v799 = vunpack.c.l.b16 %v405
        %v800 = vunpack.c.h.b16 %v405
        %v801 = vunpack.c.l.b16 %v406
        %v802 = vunpack.c.h.b16 %v406
        %v803 = vunpack.c.l.b16 %v407
        %v804 = vunpack.c.h.b16 %v407
        %v805 = vunpack.c.l.b16 %v408
        %v806 = vunpack.c.h.b16 %v408
        %v807 = vpack.c.b16 %v555, %v551
        %v808 = vpack.c.b16 %v556, %v552
        %v809 = vpack.c.b16 %v557, %v553
        %v810 = vpack.c.b16 %v558, %v554
        %v811 = vpack.c.b16 %v563, %v559
        %v812 = vpack.c.b16 %v564, %v560
        %v813 = vpack.c.b16 %v565, %v561
        %v814 = vpack.c.b16 %v566, %v562
        %v815 = vpack.c.b16 %v571, %v567
        %v816 = vpack.c.b16 %v572, %v568
        %v817 = vpack.c.b16 %v573, %v569
        %v818 = vpack.c.b16 %v574, %v570
        %v819 = vpack.c.b16 %v579, %v575
        %v820 = vpack.c.b16 %v580, %v576
        %v821 = vpack.c.b16 %v581, %v577
        %v822 = vpack.c.b16 %v582, %v578
        %v823 = vpack.c.b16 %v587, %v583
        %v824 = vpack.c.b16 %v588, %v584
        %v825 = vpack.c.b16 %v589, %v585
        %v826 = vpack.c.b16 %v590, %v586
        %v827 = vpack.c.b16 %v595, %v591
        %v828 = vpack.c.b16 %v596, %v592
        %v829 = vpack.c.b16 %v597, %v593
        %v830 = vpack.c.b16 %v598, %v594
        %v831 = vpack.c.b16 %v603, %v599
        %v832 = vpack.c.b16 %v604, %v600
        %v833 = vpack.c.b16 %v605, %v601
        %v834 = vpack.c.b16 %v606, %v602
        %v835 = vpack.c.b16 %v611, %v607
        %v836 = vpack.c.b16 %v612, %v608
        %v837 = vpack.c.b16 %v613, %v609
        %v838 = vpack.c.b16 %v614, %v610
        %v839 = vpack.c.b16 %v619, %v615
        %v840 = vpack.c.b16 %v620, %v616
        %v841 = vpack.c.b16 %v621, %v617
        %v842 = vpack.c.b16 %v622, %v618
        %v843 = vpack.c.b16 %v627, %v623
        %v844 = vpack.c.b16 %v628, %v624
        %v845 = vpack.c.b16 %v629, %v625
        %v846 = vpack.c.b16 %v630, %v626
        %v847 = vpack.c.b16 %v635, %v631
        %v848 = vpack.c.b16 %v636, %v632
        %v849 = vpack.c.b16 %v637, %v633
        %v850 = vpack.c.b16 %v638, %v634
        %v851 = vpack.c.b16 %v643, %v639
        %v852 = vpack.c.b16 %v644, %v640
        %v853 = vpack.c.b16 %v645, %v641
        %v854 = vpack.c.b16 %v646, %v642
        %v855 = vpack.c.b16 %v651, %v647
        %v856 = vpack.c.b16 %v652, %v648
        %v857 = vpack.c.b16 %v653, %v649
        %v858 = vpack.c.b16 %v654, %v650
        %v859 = vpack.c.b16 %v659, %v655
        %v860 = vpack.c.b16 %v660, %v656
        %v861 = vpack.c.b16 %v661, %v657
        %v862 = vpack.c.b16 %v662, %v658
        %v863 = vpack.c.b16 %v667, %v663
        %v864 = vpack.c.b16 %v668, %v664
        %v865 = vpack.c.b16 %v669, %v665
        %v866 = vpack.c.b16 %v670, %v666
        %v867 = vpack.c.b16 %v675, %v671
        %v868 = vpack.c.b16 %v676, %v672
        %v869 = vpack.c.b16 %v677, %v673
        %v870 = vpack.c.b16 %v678, %v674
        %v871 = vpack.c.b16 %v683, %v679
        %v872 = vpack.c.b16 %v684, %v680
        %v873 = vpack.c.b16 %v685, %v681
        %v874 = vpack.c.b16 %v686, %v682
        %v875 = vpack.c.b16 %v691, %v687
        %v876 = vpack.c.b16 %v692, %v688
        %v877 = vpack.c.b16 %v693, %v689
        %v878 = vpack.c.b16 %v694, %v690
        %v879 = vpack.c.b16 %v699, %v695
        %v880 = vpack.c.b16 %v700, %v696
        %v881 = vpack.c.b16 %v701, %v697
        %v882 = vpack.c.b16 %v702, %v698
        %v883 = vpack.c.b16 %v707, %v703
        %v884 = vpack.c.b16 %v708, %v704
        %v885 = vpack.c.b16 %v709, %v705
        %v886 = vpack.c.b16 %v710, %v706
        %v887 = vpack.c.b16 %v715, %v711
        %v888 = vpack.c.b16 %v716, %v712
        %v889 = vpack.c.b16 %v717, %v713
        %v890 = vpack.c.b16 %v718, %v714
        %v891 = vpack.c.b16 %v723, %v719
        %v892 = vpack.c.b16 %v724, %v720
        %v893 = vpack.c.b16 %v725, %v721
        %v894 = vpack.c.b16 %v726, %v722
        %v895 = vpack.c.b16 %v731, %v727
        %v896 = vpack.c.b16 %v732, %v728
        %v897 = vpack.c.b16 %v733, %v729
        %v898 = vpack.c.b16 %v734, %v730
        %v899 = vpack.c.b16 %v739, %v735
        %v900 = vpack.c.b16 %v740, %v736
        %v901 = vpack.c.b16 %v741, %v737
        %v902 = vpack.c.b16 %v742, %v738
        %v903 = vpack.c.b16 %v747, %v743
        %v904 = vpack.c.b16 %v748, %v744
        %v905 = vpack.c.b16 %v749, %v745
        %v906 = vpack.c.b16 %v750, %v746
        %v907 = vpack.c.b16 %v755, %v751
        %v908 = vpack.c.b16 %v756, %v752
        %v909 = vpack.c.b16 %v757, %v753
        %v910 = vpack.c.b16 %v758, %v754
        %v911 = vpack.c.b16 %v763, %v759
        %v912 = vpack.c.b16 %v764, %v760
        %v913 = vpack.c.b16 %v765, %v761
        %v914 = vpack.c.b16 %v766, %v762
        %v915 = vpack.c.b16 %v771, %v767
        %v916 = vpack.c.b16 %v772, %v768
        %v917 = vpack.c.b16 %v773, %v769
        %v918 = vpack.c.b16 %v774, %v770
        %v919 = vpack.c.b16 %v779, %v775
        %v920 = vpack.c.b16 %v780, %v776
        %v921 = vpack.c.b16 %v781, %v777
        %v922 = vpack.c.b16 %v782, %v778
        %v923 = vpack.c.b16 %v787, %v783
        %v924 = vpack.c.b16 %v788, %v784
        %v925 = vpack.c.b16 %v789, %v785
        %v926 = vpack.c.b16 %v790, %v786
        %v927 = vpack.c.b16 %v795, %v791
        %v928 = vpack.c.b16 %v796, %v792
        %v929 = vpack.c.b16 %v797, %v793
        %v930 = vpack.c.b16 %v798, %v794
        %v931 = vpack.c.b16 %v803, %v799
        %v932 = vpack.c.b16 %v804, %v800
        %v933 = vpack.c.b16 %v805, %v801
        %v934 = vpack.c.b16 %v806, %v802
        %1063 = vmatprep.subr.bf16.mxu0 %v836
        %1064 = vmatpush1.bf16.msra.mxu0 %v835
        %1065 = vmatprep.subr.bf16.mxu0 %v832
        %1066 = vmatpush1.bf16.msra.mxu0 %v831
        %1067 = vmatprep.subr.bf16.mxu0 %v828
        %1068 = vmatpush1.bf16.msra.mxu0 %v827
        %1069 = vmatprep.subr.bf16.mxu0 %v824
        %1070 = vmatpush1.bf16.msra.mxu0 %v823
        %1071 = vmatprep.subr.bf16.mxu0 %v820
        %1072 = vmatpush1.bf16.msra.mxu0 %v819
        %1073 = vmatprep.subr.bf16.mxu0 %v816
        %1074 = vmatpush1.bf16.msra.mxu0 %v815
        %1075 = vmatprep.subr.bf16.mxu0 %v812
        %1076 = vmatpush1.bf16.msra.mxu0 %v811
        %1077 = vmatprep.subr.bf16.mxu0 %v808
        %1078 = vmatpush1.bf16.msra.mxu0 %v807
        %1079 = vmatprep.subr.bf16.mxu0 %v868
        %1080 = vmatpush2.bf16.msra.mxu0 %v867
        %1081 = vmatprep.subr.bf16.mxu0 %v864
        %1082 = vmatpush2.bf16.msra.mxu0 %v863
        %1083 = vmatprep.subr.bf16.mxu0 %v860
        %1084 = vmatpush2.bf16.msra.mxu0 %v859
        %1085 = vmatprep.subr.bf16.mxu0 %v856
        %1086 = vmatpush2.bf16.msra.mxu0 %v855
        %1087 = vmatprep.subr.bf16.mxu0 %v852
        %1088 = vmatpush2.bf16.msra.mxu0 %v851
        %1089 = vmatprep.subr.bf16.mxu0 %v848
        %1090 = vmatpush2.bf16.msra.mxu0 %v847
        %1091 = vmatprep.subr.bf16.mxu0 %v844
        %1092 = vmatpush2.bf16.msra.mxu0 %v843
        %1093 = vmatprep.subr.bf16.mxu0 %v840
        %1094 = vmatpush2.bf16.msra.mxu0 %v839
        %1095 = vmatprep.mubr.bf16.mxu0 %v416
        %1096 = vmatmul.mubr.bf16.gmra.mxu0 %v415
        %v1097 = vpop.f32.mrf.mxu0
        %v1098 = vadd.f32 0.0, %v1097
        %v1099 = vpop.f32.mrf.mxu0
        %v1100 = vadd.f32 0.0, %v1099
        %v1101 = vpop.f32.mrf.mxu0
        %v1102 = vpop.f32.mrf.mxu0
        %1103 = vdwg.mxu0
        %1104 = vmatprep.subr.bf16.mxu0 %v900
        %1105 = vmatpush1.bf16.msra.mxu0 %v899
        %1106 = vmatprep.subr.bf16.mxu0 %v896
        %1107 = vmatpush1.bf16.msra.mxu0 %v895
        %1108 = vmatprep.subr.bf16.mxu0 %v892
        %1109 = vmatpush1.bf16.msra.mxu0 %v891
        %1110 = vmatprep.subr.bf16.mxu0 %v888
        %1111 = vmatpush1.bf16.msra.mxu0 %v887
        %1112 = vmatprep.subr.bf16.mxu0 %v884
        %1113 = vmatpush1.bf16.msra.mxu0 %v883
        %1114 = vmatprep.subr.bf16.mxu0 %v880
        %1115 = vmatpush1.bf16.msra.mxu0 %v879
        %1116 = vmatprep.subr.bf16.mxu0 %v876
        %1117 = vmatpush1.bf16.msra.mxu0 %v875
        %1118 = vmatprep.subr.bf16.mxu0 %v872
        %1119 = vmatpush1.bf16.msra.mxu0 %v871
        %1120 = vmatprep.subr.bf16.mxu0 %v932
        %1121 = vmatpush2.bf16.msra.mxu0 %v931
        %1122 = vmatprep.subr.bf16.mxu0 %v928
        %1123 = vmatpush2.bf16.msra.mxu0 %v927
        %1124 = vmatprep.subr.bf16.mxu0 %v924
        %1125 = vmatpush2.bf16.msra.mxu0 %v923
        %1126 = vmatprep.subr.bf16.mxu0 %v920
        %1127 = vmatpush2.bf16.msra.mxu0 %v919
        %1128 = vmatprep.subr.bf16.mxu0 %v916
        %1129 = vmatpush2.bf16.msra.mxu0 %v915
        %1130 = vmatprep.subr.bf16.mxu0 %v912
        %1131 = vmatpush2.bf16.msra.mxu0 %v911
        %1132 = vmatprep.subr.bf16.mxu0 %v908
        %1133 = vmatpush2.bf16.msra.mxu0 %v907
        %1134 = vmatprep.subr.bf16.mxu0 %v904
        %1135 = vmatpush2.bf16.msra.mxu0 %v903
        %1136 = vmatprep.mubr.bf16.mxu0 %v418
        %1137 = vmatmul.mubr.bf16.gmra.mxu0 %v417
        %v1138 = vpop.f32.mrf.mxu0
        %v1139 = vadd.f32 %v1098, %v1138
        %v1140 = vpop.f32.mrf.mxu0
        %v1141 = vadd.f32 %v1100, %v1140
        %v1142 = vpop.f32.mrf.mxu0
        %v1143 = vpop.f32.mrf.mxu0
        %1144 = vdwg.mxu0
        %1145 = vmatprep.subr.bf16.mxu0 %v838
        %1146 = vmatpush1.bf16.msra.mxu0 %v837
        %1147 = vmatprep.subr.bf16.mxu0 %v834
        %1148 = vmatpush1.bf16.msra.mxu0 %v833
        %1149 = vmatprep.subr.bf16.mxu0 %v830
        %1150 = vmatpush1.bf16.msra.mxu0 %v829
        %1151 = vmatprep.subr.bf16.mxu0 %v826
        %1152 = vmatpush1.bf16.msra.mxu0 %v825
        %1153 = vmatprep.subr.bf16.mxu0 %v822
        %1154 = vmatpush1.bf16.msra.mxu0 %v821
        %1155 = vmatprep.subr.bf16.mxu0 %v818
        %1156 = vmatpush1.bf16.msra.mxu0 %v817
        %1157 = vmatprep.subr.bf16.mxu0 %v814
        %1158 = vmatpush1.bf16.msra.mxu0 %v813
        %1159 = vmatprep.subr.bf16.mxu0 %v810
        %1160 = vmatpush1.bf16.msra.mxu0 %v809
        %1161 = vmatprep.subr.bf16.mxu0 %v870
        %1162 = vmatpush2.bf16.msra.mxu0 %v869
        %1163 = vmatprep.subr.bf16.mxu0 %v866
        %1164 = vmatpush2.bf16.msra.mxu0 %v865
        %1165 = vmatprep.subr.bf16.mxu0 %v862
        %1166 = vmatpush2.bf16.msra.mxu0 %v861
        %1167 = vmatprep.subr.bf16.mxu0 %v858
        %1168 = vmatpush2.bf16.msra.mxu0 %v857
        %1169 = vmatprep.subr.bf16.mxu0 %v854
        %1170 = vmatpush2.bf16.msra.mxu0 %v853
        %1171 = vmatprep.subr.bf16.mxu0 %v850
        %1172 = vmatpush2.bf16.msra.mxu0 %v849
        %1173 = vmatprep.subr.bf16.mxu0 %v846
        %1174 = vmatpush2.bf16.msra.mxu0 %v845
        %1175 = vmatprep.subr.bf16.mxu0 %v842
        %1176 = vmatpush2.bf16.msra.mxu0 %v841
        %1177 = vmatprep.mubr.bf16.mxu0 %v416
        %1178 = vmatmul.mubr.bf16.gmra.mxu0 %v415
        %v1179 = vpop.f32.mrf.mxu0
        %v1180 = vadd.f32 0.0, %v1179
        %v1181 = vpop.f32.mrf.mxu0
        %v1182 = vadd.f32 0.0, %v1181
        %v1183 = vpop.f32.mrf.mxu0
        %v1184 = vpop.f32.mrf.mxu0
        %1185 = vdwg.mxu0
        %1186 = vmatprep.subr.bf16.mxu0 %v902
        %1187 = vmatpush1.bf16.msra.mxu0 %v901
        %1188 = vmatprep.subr.bf16.mxu0 %v898
        %1189 = vmatpush1.bf16.msra.mxu0 %v897
        %1190 = vmatprep.subr.bf16.mxu0 %v894
        %1191 = vmatpush1.bf16.msra.mxu0 %v893
        %1192 = vmatprep.subr.bf16.mxu0 %v890
        %1193 = vmatpush1.bf16.msra.mxu0 %v889
        %1194 = vmatprep.subr.bf16.mxu0 %v886
        %1195 = vmatpush1.bf16.msra.mxu0 %v885
        %1196 = vmatprep.subr.bf16.mxu0 %v882
        %1197 = vmatpush1.bf16.msra.mxu0 %v881
        %1198 = vmatprep.subr.bf16.mxu0 %v878
        %1199 = vmatpush1.bf16.msra.mxu0 %v877
        %1200 = vmatprep.subr.bf16.mxu0 %v874
        %1201 = vmatpush1.bf16.msra.mxu0 %v873
        %1202 = vmatprep.subr.bf16.mxu0 %v934
        %1203 = vmatpush2.bf16.msra.mxu0 %v933
        %1204 = vmatprep.subr.bf16.mxu0 %v930
        %1205 = vmatpush2.bf16.msra.mxu0 %v929
        %1206 = vmatprep.subr.bf16.mxu0 %v926
        %1207 = vmatpush2.bf16.msra.mxu0 %v925
        %1208 = vmatprep.subr.bf16.mxu0 %v922
        %1209 = vmatpush2.bf16.msra.mxu0 %v921
        %1210 = vmatprep.subr.bf16.mxu0 %v918
        %1211 = vmatpush2.bf16.msra.mxu0 %v917
        %1212 = vmatprep.subr.bf16.mxu0 %v914
        %1213 = vmatpush2.bf16.msra.mxu0 %v913
        %1214 = vmatprep.subr.bf16.mxu0 %v910
        %1215 = vmatpush2.bf16.msra.mxu0 %v909
        %1216 = vmatprep.subr.bf16.mxu0 %v906
        %1217 = vmatpush2.bf16.msra.mxu0 %v905
        %1218 = vmatprep.mubr.bf16.mxu0 %v418
        %1219 = vmatmul.mubr.bf16.gmra.mxu0 %v417
        %v1220 = vpop.f32.mrf.mxu0
        %v1221 = vadd.f32 %v1180, %v1220
        %v1222 = vpop.f32.mrf.mxu0
        %v1223 = vadd.f32 %v1182, %v1222
        %v1224 = vpop.f32.mrf.mxu0
        %v1225 = vpop.f32.mrf.mxu0
        %1226 = vdwg.mxu0
        %v1227 = vadd.f32 %v275, %v1139
        %v1228 = vadd.f32 %v276, %v1141
        %v1229 = vadd.f32 %v277, %v1221
        %v1230 = vadd.f32 %v278, %v1223
        %1231 = vst [vmem:[#allocation2] sm:$0xff] %v1227
        %1232 = vst [vmem:[#allocation2 + $0x8] sm:$0xff] %v1228
        %1233 = vst [vmem:[#allocation2 + $0x10] sm:$0xff] %v1229
        %1234 = vst [vmem:[#allocation2 + $0x18] sm:$0xff] %v1230
        // Predicated region
        $region49: #{tpu_custom_call.1} parent=31 // pred_check
          %p1235 = pneg %p267
        $region50: #{tpu_custom_call.1} parent=31 // pred_check_branch
          %1237 = sbr.rel (%p1235) target = $region52
        $region51: #{tpu_custom_call.1} parent=31 // pred_region
          %v1238 = vld [vmem:[#allocation2] sm:$0xff]
          %v1239 = vld [vmem:[#allocation2 + $0x8] sm:$0xff]
          %v1240 = vld [vmem:[#allocation2 + $0x10] sm:$0xff]
          %v1241 = vld [vmem:[#allocation2 + $0x18] sm:$0xff]
          %v1242 = vld [vmem:[%s234] sm:$0xff]
          %v1243 = vld [vmem:[%s234 + $0x8] sm:$0xff]
          %v1244 = vld [vmem:[%s234 + $0x10] sm:$0xff]
          %v1245 = vld [vmem:[%s234 + $0x18] sm:$0xff]
          %v1246 = vadd.f32 %v1238, %v1242
          %v1247 = vadd.f32 %v1239, %v1243
          %v1248 = vadd.f32 %v1240, %v1244
          %v1249 = vadd.f32 %v1241, %v1245
          %v1250 = vmax.f32 %v1246, 0.0
          %v1251 = vmax.f32 %v1247, 0.0
          %v1252 = vmax.f32 %v1248, 0.0
          %v1253 = vmax.f32 %v1249, 0.0
          %v1254 = vpack.c.bf16 %v1250, %v1250
          %v1255 = vpack.c.bf16 %v1251, %v1251
          %v1256 = vpack.c.bf16 %v1252, %v1252
          %v1257 = vpack.c.bf16 %v1253, %v1253
          %v1262 = vunpack.c.l.b16 %v1254
          %v1263 = vunpack.c.l.b16 %v1255
          %v1264 = vunpack.c.l.b16 %v1256
          %v1265 = vunpack.c.l.b16 %v1257
          %v1266 = vpack.c.b16 %v1263, %v1262
          %v1267 = vpack.c.b16 %v1265, %v1264
          %1270 = vst [vmem:[%s261] sm:$0xff] %v1266
          %1271 = vst [vmem:[%s261 + $0x8] sm:$0xff] %v1267
        $region52: #{tpu_custom_call.1} parent=31 // pred_fallthru
          _
        %s1272 = sand.u32 %s121, 1
        %s1273 = scalar_lea.sflag [#allocation5], %s1272
        %s1274 = sand.u32 %s121, 1
        %s1275 = smul.addr %s1274, 16
        %s1276 = scalar_lea.vmem [#allocation9], %s1275
        // Predicated region
        $region53: #{tpu_custom_call.1} parent=31 // pred_check
          %p1277 = pneg %p131
        $region54: #{tpu_custom_call.1} parent=31 // pred_check_branch
          %1279 = sbr.rel (%p1277) target = $region56
        $region55: #{tpu_custom_call.1} parent=31 // pred_region
          %s1280 = smul.u32 4, %s25
          %s1282 = ssub.s32 256, 256
          %1283 = vsyncadd %s1273, %s1282
          %s1284 = smul.addr %s1280, 64
          %s1285 = scalar_lea.hbm %s3, %s1284
          %s1287 = sshll.u32 %s1276, 4
          %s1288 = int_to_ptr.vmem [resolvable:$true] %s1287
          %1290 = dma.vmem_to_hbm [thread:$0]  %s1288, 256, %s1285, %s1273
        $region56: #{tpu_custom_call.1} parent=31 // pred_fallthru
          _
      $region32: #{tpu_custom_call.1} parent=5 // pred_fallthru
        _
      %p1291 = scmp.le.s32.totalorder 2, %s16
      // Predicated region
      $region57: #{tpu_custom_call.1} parent=5 // pred_check
        %p1292 = pneg %p1291
      $region58: #{tpu_custom_call.1} parent=5 // pred_check_branch
        %1294 = sbr.rel (%p1292) target = $region60
      $region59: #{tpu_custom_call.1} parent=5 // pred_region
        %s1295 = ssub.s32 %s16, 2
        // Predicated region
        $region61: #{tpu_custom_call.1} parent=59 // pred_check
          %p1296 = pneg %p137
        $region62: #{tpu_custom_call.1} parent=59 // pred_check_branch
          %1298 = sbr.rel (%p1296) target = $region64
        $region63: #{tpu_custom_call.1} parent=59 // pred_region
          %s1299 = sand.u32 %s122, 1
          %s1300 = scalar_lea.sflag [#allocation5], %s1299
          %s1301 = sand.u32 %s122, 1
          %s1302 = smul.addr %s1301, 16
          %s1303 = scalar_lea.vmem [#allocation9], %s1302
          %1304 = dma.done %s1300, 256
        $region64: #{tpu_custom_call.1} parent=59 // pred_fallthru
          _
      $region60: #{tpu_custom_call.1} parent=5 // pred_fallthru
        _
    $region6: #{tpu_custom_call.1} parent=1 // loop_footer
      %s20 = sadd.s32 1, %s16
    $region7: #{tpu_custom_call.1} parent=1 // loop_footer_branch
      %15 = sbr.rel target = $region3
    $region8: #{tpu_custom_call.1} parent=1 // loop_exit
      _
    %1305 = vsyncpa [#allocation4], 1
    %s1306 = scalar_lea.sflag [#allocation4], 1
    %1307 = vsyncpa %s1306, 1
    %1308 = vsyncpa [#allocation7], 1
    %s1309 = scalar_lea.sflag [#allocation7], 1
    %1310 = vsyncpa %s1309, 1
    %1311 = vsyncpa [#allocation5], 1
    %s1312 = scalar_lea.sflag [#allocation5], 1
    %1313 = vsyncpa %s1312, 1

</llo_original>
